<compile_context>
chip_gen: v7x
topology: tpu7x:2x2x1
jax: 0.10.0
libtpu: 0.0.40
codegen_flags: <defaults>
</compile_context>

<pallas_src>
import functools

import jax
import jax.numpy as jnp
from jax.experimental import pallas as pl
from jax.experimental.pallas import tpu as pltpu


_LANE = 128     # last-dim (lane) tiling
_SUBLANE = 8    # second-to-last-dim (sublane) tiling for f32


def _round_up(x, m):
    return ((x + m - 1) // m) * m


def _gelu_exact(x):
    # PyTorch nn.GELU() default (approximate='none'): 0.5*x*(1 + erf(x/sqrt(2)))
    return 0.5 * x * (1.0 + jax.lax.erf(x * 0.7071067811865476))


def _mlp_kernel(x_ref, w1_ref, b1_ref, w2_ref, b2_ref, w3_ref, b3_ref, o_ref):
    x = x_ref[...]                                                     # (tb, in_p)
    h = jnp.dot(x, w1_ref[...], preferred_element_type=jnp.float32)    # (tb, n_p)
    h = _gelu_exact(h + b1_ref[...])
    h = jnp.dot(h.astype(w2_ref.dtype), w2_ref[...],
                preferred_element_type=jnp.float32)                    # (tb, n_p)
    h = _gelu_exact(h + b2_ref[...])
    o = jnp.dot(h.astype(w3_ref.dtype), w3_ref[...],
                preferred_element_type=jnp.float32)                    # (tb, out_p)
    o_ref[...] = (o + b3_ref[...]).astype(o_ref.dtype)


@functools.partial(
    jax.jit,
    static_argnames=("block_batch", "single_buffer_weights", "compute_dtype"),
)
def _mlp_forward_impl(x, params, *, block_batch, single_buffer_weights,
                      compute_dtype):
    w1, b1, w2, b2, w3, b3 = params
    batch, input_dim = x.shape
    n_units = w1.shape[1]
    output_dim = w3.shape[1]

    # --- batch tile: large MXU-friendly tile, never larger than the batch ---
    bb = _round_up(min(block_batch, _round_up(batch, _SUBLANE)), _SUBLANE)
    batch_p = _round_up(batch, bb)

    # --- lane-pad every feature dim to a multiple of 128 (exact: zero pad) ---
    in_p = _round_up(input_dim, _LANE)
    n_p = _round_up(n_units, _LANE)
    out_p = _round_up(output_dim, _LANE)

    def pad2(a, rows, cols):
        return jnp.pad(a, ((0, rows - a.shape[0]), (0, cols - a.shape[1])))

    x_p = pad2(x, batch_p, in_p)
    w1_p, b1_p = pad2(w1, in_p, n_p), pad2(b1, 1, n_p)
    w2_p, b2_p = pad2(w2, n_p, n_p), pad2(b2, 1, n_p)
    w3_p, b3_p = pad2(w3, n_p, out_p), pad2(b3, 1, out_p)

    if compute_dtype != jnp.float32:
        # bf16 matmul path (v6e/v7x): weights/activations bf16, accumulate f32,
        # biases + GELU stay f32.
        x_p = x_p.astype(compute_dtype)
        w1_p = w1_p.astype(compute_dtype)
        w2_p = w2_p.astype(compute_dtype)
        w3_p = w3_p.astype(compute_dtype)

    grid = (batch_p // bb,)

    # Grid-invariant operands: request single buffering to halve their VMEM.
    weight_kwargs = {}
    if single_buffer_weights:
        weight_kwargs["pipeline_mode"] = pl.Buffered(buffer_count=1)

    def full(shape):
        return pl.BlockSpec(shape, lambda i: (0, 0), **weight_kwargs)

    # --- VMEM budget (explicit, with headroom, capped for v7x's 64 MiB) ---
    itemsize = jnp.dtype(compute_dtype).itemsize
    nbuf_w = 1 if single_buffer_weights else 2
    weight_bytes = nbuf_w * (
        (in_p * n_p + n_p * n_p + n_p * out_p) * itemsize
        + (2 * n_p + out_p) * 4
    )
    act_bytes = 2 * bb * (in_p * itemsize + out_p * 4)   # double-buffered x / out
    scratch_bytes = 4 * bb * n_p * 4                     # in-kernel f32 temporaries
    vmem_limit = int(min(
        64 * 2**20,
        max(32 * 2**20, 1.5 * (weight_bytes + act_bytes + scratch_bytes)),
    ))

    out_padded = pl.pallas_call(
        _mlp_kernel,
        out_shape=jax.ShapeDtypeStruct((batch_p, out_p), jnp.float32),
        grid_spec=pltpu.PrefetchScalarGridSpec(
            num_scalar_prefetch=0,
            grid=grid,
            in_specs=[
                pl.BlockSpec((bb, in_p), lambda i: (i, 0)),  # x tile
                full((in_p, n_p)),                           # w1
                full((1, n_p)),                              # b1
                full((n_p, n_p)),                            # w2
                full((1, n_p)),                              # b2
                full((n_p, out_p)),                          # w3
                full((1, out_p)),                            # b3
            ],
            out_specs=pl.BlockSpec((bb, out_p), lambda i: (i, 0)),
        ),
        compiler_params=pltpu.CompilerParams(
            dimension_semantics=("parallel",),
            vmem_limit_bytes=vmem_limit,
        ),
    )(x_p, w1_p, b1_p, w2_p, b2_p, w3_p, b3_p)

    return out_padded[:batch, :output_dim]


def mlp_forward(x, params, *, block_batch=256, compute_dtype=jnp.float32):
    """Forward pass of Net.  x: (batch, input_dim) float32."""
    try:
        out = _mlp_forward_impl(
            x, params, block_batch=block_batch,
            single_buffer_weights=True, compute_dtype=compute_dtype)
        return jax.block_until_ready(out)
    except Exception:
        # Fallback if this jax/Mosaic build rejects pipeline_mode=Buffered(1):
        # identical kernel with default double-buffered weight specs.
        return _mlp_forward_impl(
            x, params, block_batch=block_batch,
            single_buffer_weights=False, compute_dtype=compute_dtype)


def init_params(key, input_dim, n_units, output_dim):
    """Deterministic init mirroring nn.Linear's uniform(-1/sqrt(fan_in), +) init.

    Weights are stored transposed, i.e. (in_features, out_features).
    """
    def linear(k, fan_in, fan_out):
        kw, kb = jax.random.split(k)
        bound = 1.0 / jnp.sqrt(fan_in)
        w = jax.random.uniform(kw, (fan_in, fan_out), jnp.float32, -bound, bound)
        b = jax.random.uniform(kb, (1, fan_out), jnp.float32, -bound, bound)
        return w, b

    k1, k2, k3 = jax.random.split(key, 3)
    w1, b1 = linear(k1, input_dim, n_units)
    w2, b2 = linear(k2, n_units, n_units)
    w3, b3 = linear(k3, n_units, output_dim)
    return (w1, b1, w2, b2, w3, b3)


def mlp_forward_ref(x, params):
    """Pure-JAX reference for correctness checking."""
    w1, b1, w2, b2, w3, b3 = params
    h = jax.nn.gelu(x @ w1 + b1, approximate=False)
    h = jax.nn.gelu(h @ w2 + b2, approximate=False)
    return h @ w3 + b3


if __name__ == "__main__":
    # Small shapes consistent with the module: x is (batch, input_dim),
    # batch_size=32 and n_units=100 are the module defaults.
    batch, input_dim, n_units, output_dim = 32, 8, 100, 4

    key = jax.random.PRNGKey(0)
    kx, kp = jax.random.split(key)
    x = jax.random.normal(kx, (batch, input_dim), jnp.float32)
    params = init_params(kp, input_dim, n_units, output_dim)

    out = mlp_forward(x, params)
    out = jax.block_until_ready(out)

    ref = mlp_forward_ref(x, params)
    assert out.shape == (batch, output_dim)
    assert jnp.allclose(out, ref, atol=1e-5, rtol=1e-5), "mismatch vs. JAX reference"

    print("KERNEL_OK")
</pallas_src>

<mosaic_0001>
module attributes {stable_mosaic.version = 11 : i64} {
  func.func @_mlp_kernel(%arg0: i32, %arg1: memref<32x128xf32, #tpu.memory_space<vmem>>, %arg2: memref<128x128xf32, #tpu.memory_space<vmem>>, %arg3: memref<1x128xf32, #tpu.memory_space<vmem>>, %arg4: memref<128x128xf32, #tpu.memory_space<vmem>>, %arg5: memref<1x128xf32, #tpu.memory_space<vmem>>, %arg6: memref<128x128xf32, #tpu.memory_space<vmem>>, %arg7: memref<1x128xf32, #tpu.memory_space<vmem>>, %arg8: memref<32x128xf32, #tpu.memory_space<vmem>>) attributes {dimension_semantics = [#tpu.dimension_semantics<parallel>], iteration_bounds = array<i64: 1>, scalar_prefetch = 0 : i64, scratch_operands = 0 : i64, tpu.core_type = #tpu.core_type<tc>, window_params = [{transform_indices = @transform_0, window_bounds = array<i64: 32, 128>}, {pipeline_mode = #tpu.pipeline_mode<synchronous>, transform_indices = @transform_1, window_bounds = array<i64: 128, 128>}, {pipeline_mode = #tpu.pipeline_mode<synchronous>, transform_indices = @transform_2, window_bounds = array<i64: 1, 128>}, {pipeline_mode = #tpu.pipeline_mode<synchronous>, transform_indices = @transform_3, window_bounds = array<i64: 128, 128>}, {pipeline_mode = #tpu.pipeline_mode<synchronous>, transform_indices = @transform_4, window_bounds = array<i64: 1, 128>}, {pipeline_mode = #tpu.pipeline_mode<synchronous>, transform_indices = @transform_5, window_bounds = array<i64: 128, 128>}, {pipeline_mode = #tpu.pipeline_mode<synchronous>, transform_indices = @transform_6, window_bounds = array<i64: 1, 128>}, {transform_indices = @transform_7, window_bounds = array<i64: 32, 128>}]} {
    %c0 = arith.constant 0 : index
    %c0_0 = arith.constant 0 : index
    %0 = vector.load %arg1[%c0, %c0_0] : memref<32x128xf32, #tpu.memory_space<vmem>>, vector<32x128xf32>
    %c0_1 = arith.constant 0 : index
    %c0_2 = arith.constant 0 : index
    %1 = vector.load %arg2[%c0_1, %c0_2] : memref<128x128xf32, #tpu.memory_space<vmem>>, vector<128x128xf32>
    %cst = arith.constant dense<0.000000e+00> : vector<32x128xf32>
    %2 = tpu.matmul %0, %1, %cst {dimension_numbers = #tpu.dot_dimension_numbers<[1], [0], [0], [1], [0, 0, 1, 1], [], []>} : vector<32x128xf32>, vector<128x128xf32>, vector<32x128xf32> -> vector<32x128xf32>
    %c0_3 = arith.constant 0 : index
    %c0_4 = arith.constant 0 : index
    %3 = vector.load %arg3[%c0_3, %c0_4] : memref<1x128xf32, #tpu.memory_space<vmem>>, vector<1x128xf32>
    %4 = vector.broadcast %3 : vector<1x128xf32> to vector<32x128xf32>
    %5 = arith.addf %2, %4 : vector<32x128xf32>
    %cst_5 = arith.constant 5.000000e-01 : f32
    %6 = vector.broadcast %cst_5 : f32 to vector<32x128xf32>
    %7 = arith.mulf %6, %5 : vector<32x128xf32>
    %cst_6 = arith.constant 0.707106769 : f32
    %8 = vector.broadcast %cst_6 : f32 to vector<32x128xf32>
    %9 = arith.mulf %5, %8 : vector<32x128xf32>
    %10 = math.erf %9 : vector<32x128xf32>
    %cst_7 = arith.constant 1.000000e+00 : f32
    %11 = vector.broadcast %cst_7 : f32 to vector<32x128xf32>
    %12 = arith.addf %11, %10 : vector<32x128xf32>
    %13 = arith.mulf %7, %12 : vector<32x128xf32>
    %c0_8 = arith.constant 0 : index
    %c0_9 = arith.constant 0 : index
    %14 = vector.load %arg4[%c0_8, %c0_9] : memref<128x128xf32, #tpu.memory_space<vmem>>, vector<128x128xf32>
    %cst_10 = arith.constant dense<0.000000e+00> : vector<32x128xf32>
    %15 = tpu.matmul %13, %14, %cst_10 {dimension_numbers = #tpu.dot_dimension_numbers<[1], [0], [0], [1], [0, 0, 1, 1], [], []>} : vector<32x128xf32>, vector<128x128xf32>, vector<32x128xf32> -> vector<32x128xf32>
    %c0_11 = arith.constant 0 : index
    %c0_12 = arith.constant 0 : index
    %16 = vector.load %arg5[%c0_11, %c0_12] : memref<1x128xf32, #tpu.memory_space<vmem>>, vector<1x128xf32>
    %17 = vector.broadcast %16 : vector<1x128xf32> to vector<32x128xf32>
    %18 = arith.addf %15, %17 : vector<32x128xf32>
    %cst_13 = arith.constant 5.000000e-01 : f32
    %19 = vector.broadcast %cst_13 : f32 to vector<32x128xf32>
    %20 = arith.mulf %19, %18 : vector<32x128xf32>
    %cst_14 = arith.constant 0.707106769 : f32
    %21 = vector.broadcast %cst_14 : f32 to vector<32x128xf32>
    %22 = arith.mulf %18, %21 : vector<32x128xf32>
    %23 = math.erf %22 : vector<32x128xf32>
    %cst_15 = arith.constant 1.000000e+00 : f32
    %24 = vector.broadcast %cst_15 : f32 to vector<32x128xf32>
    %25 = arith.addf %24, %23 : vector<32x128xf32>
    %26 = arith.mulf %20, %25 : vector<32x128xf32>
    %c0_16 = arith.constant 0 : index
    %c0_17 = arith.constant 0 : index
    %27 = vector.load %arg6[%c0_16, %c0_17] : memref<128x128xf32, #tpu.memory_space<vmem>>, vector<128x128xf32>
    %cst_18 = arith.constant dense<0.000000e+00> : vector<32x128xf32>
    %28 = tpu.matmul %26, %27, %cst_18 {dimension_numbers = #tpu.dot_dimension_numbers<[1], [0], [0], [1], [0, 0, 1, 1], [], []>} : vector<32x128xf32>, vector<128x128xf32>, vector<32x128xf32> -> vector<32x128xf32>
    %c0_19 = arith.constant 0 : index
    %c0_20 = arith.constant 0 : index
    %29 = vector.load %arg7[%c0_19, %c0_20] : memref<1x128xf32, #tpu.memory_space<vmem>>, vector<1x128xf32>
    %30 = vector.broadcast %29 : vector<1x128xf32> to vector<32x128xf32>
    %31 = arith.addf %28, %30 : vector<32x128xf32>
    %c0_21 = arith.constant 0 : index
    %c0_22 = arith.constant 0 : index
    %32 = vector.load %arg8[%c0_21, %c0_22] : memref<32x128xf32, #tpu.memory_space<vmem>>, vector<32x128xf32>
    tpu.vector_store %arg8[%c0_21, %c0_22], %31 {strides = array<i32>} : memref<32x128xf32, #tpu.memory_space<vmem>>, vector<32x128xf32>,
    return
  }
  func.func @transform_0(%arg0: i32) -> (i32, i32) {
    %c0_i32 = arith.constant 0 : i32
    %c0_i32_0 = arith.constant 0 : i32
    return %arg0, %c0_i32 : i32, i32
  }
  func.func @transform_1(%arg0: i32) -> (i32, i32) {
    %c0_i32 = arith.constant 0 : i32
    %c0_i32_0 = arith.constant 0 : i32
    %c0_i32_1 = arith.constant 0 : i32
    return %c0_i32, %c0_i32_0 : i32, i32
  }
  func.func @transform_2(%arg0: i32) -> (i32, i32) {
    %c0_i32 = arith.constant 0 : i32
    %c0_i32_0 = arith.constant 0 : i32
    %c0_i32_1 = arith.constant 0 : i32
    return %c0_i32, %c0_i32_0 : i32, i32
  }
  func.func @transform_3(%arg0: i32) -> (i32, i32) {
    %c0_i32 = arith.constant 0 : i32
    %c0_i32_0 = arith.constant 0 : i32
    %c0_i32_1 = arith.constant 0 : i32
    return %c0_i32, %c0_i32_0 : i32, i32
  }
  func.func @transform_4(%arg0: i32) -> (i32, i32) {
    %c0_i32 = arith.constant 0 : i32
    %c0_i32_0 = arith.constant 0 : i32
    %c0_i32_1 = arith.constant 0 : i32
    return %c0_i32, %c0_i32_0 : i32, i32
  }
  func.func @transform_5(%arg0: i32) -> (i32, i32) {
    %c0_i32 = arith.constant 0 : i32
    %c0_i32_0 = arith.constant 0 : i32
    %c0_i32_1 = arith.constant 0 : i32
    return %c0_i32, %c0_i32_0 : i32, i32
  }
  func.func @transform_6(%arg0: i32) -> (i32, i32) {
    %c0_i32 = arith.constant 0 : i32
    %c0_i32_0 = arith.constant 0 : i32
    %c0_i32_1 = arith.constant 0 : i32
    return %c0_i32, %c0_i32_0 : i32, i32
  }
  func.func @transform_7(%arg0: i32) -> (i32, i32) {
    %c0_i32 = arith.constant 0 : i32
    %c0_i32_0 = arith.constant 0 : i32
    return %arg0, %c0_i32 : i32, i32
  }
}

module attributes {stable_mosaic.version = 11 : i64} {
  func.func @_mlp_kernel(%arg0: i32, %arg1: memref<32x128xf32, #tpu.memory_space<vmem>>, %arg2: memref<128x128xf32, #tpu.memory_space<vmem>>, %arg3: memref<1x128xf32, #tpu.memory_space<vmem>>, %arg4: memref<128x128xf32, #tpu.memory_space<vmem>>, %arg5: memref<1x128xf32, #tpu.memory_space<vmem>>, %arg6: memref<128x128xf32, #tpu.memory_space<vmem>>, %arg7: memref<1x128xf32, #tpu.memory_space<vmem>>, %arg8: memref<32x128xf32, #tpu.memory_space<vmem>>) attributes {dimension_semantics = [#tpu.dimension_semantics<parallel>], iteration_bounds = array<i64: 1>, scalar_prefetch = 0 : i64, scratch_operands = 0 : i64, tpu.core_type = #tpu.core_type<tc>, window_params = [{transform_indices = @transform_0, window_bounds = array<i64: 32, 128>}, {pipeline_mode = #tpu.pipeline_mode<synchronous>, transform_indices = @transform_1, window_bounds = array<i64: 128, 128>}, {pipeline_mode = #tpu.pipeline_mode<synchronous>, transform_indices = @transform_2, window_bounds = array<i64: 1, 128>}, {pipeline_mode = #tpu.pipeline_mode<synchronous>, transform_indices = @transform_3, window_bounds = array<i64: 128, 128>}, {pipeline_mode = #tpu.pipeline_mode<synchronous>, transform_indices = @transform_4, window_bounds = array<i64: 1, 128>}, {pipeline_mode = #tpu.pipeline_mode<synchronous>, transform_indices = @transform_5, window_bounds = array<i64: 128, 128>}, {pipeline_mode = #tpu.pipeline_mode<synchronous>, transform_indices = @transform_6, window_bounds = array<i64: 1, 128>}, {transform_indices = @transform_7, window_bounds = array<i64: 32, 128>}]} {
    %c0 = arith.constant 0 : index
    %c0_0 = arith.constant 0 : index
    %0 = vector.load %arg1[%c0, %c0_0] : memref<32x128xf32, #tpu.memory_space<vmem>>, vector<32x128xf32>
    %c0_1 = arith.constant 0 : index
    %c0_2 = arith.constant 0 : index
    %1 = vector.load %arg2[%c0_1, %c0_2] : memref<128x128xf32, #tpu.memory_space<vmem>>, vector<128x128xf32>
    %cst = arith.constant dense<0.000000e+00> : vector<32x128xf32>
    %2 = tpu.matmul %0, %1, %cst {dimension_numbers = #tpu.dot_dimension_numbers<[1], [0], [0], [1], [0, 0, 1, 1], [], []>} : vector<32x128xf32>, vector<128x128xf32>, vector<32x128xf32> -> vector<32x128xf32>
    %c0_3 = arith.constant 0 : index
    %c0_4 = arith.constant 0 : index
    %3 = vector.load %arg3[%c0_3, %c0_4] : memref<1x128xf32, #tpu.memory_space<vmem>>, vector<1x128xf32>
    %4 = vector.broadcast %3 : vector<1x128xf32> to vector<32x128xf32>
    %5 = arith.addf %2, %4 : vector<32x128xf32>
    %cst_5 = arith.constant 5.000000e-01 : f32
    %6 = vector.broadcast %cst_5 : f32 to vector<32x128xf32>
    %7 = arith.mulf %6, %5 : vector<32x128xf32>
    %cst_6 = arith.constant 0.707106769 : f32
    %8 = vector.broadcast %cst_6 : f32 to vector<32x128xf32>
    %9 = arith.mulf %5, %8 : vector<32x128xf32>
    %10 = math.erf %9 : vector<32x128xf32>
    %cst_7 = arith.constant 1.000000e+00 : f32
    %11 = vector.broadcast %cst_7 : f32 to vector<32x128xf32>
    %12 = arith.addf %11, %10 : vector<32x128xf32>
    %13 = arith.mulf %7, %12 : vector<32x128xf32>
    %c0_8 = arith.constant 0 : index
    %c0_9 = arith.constant 0 : index
    %14 = vector.load %arg4[%c0_8, %c0_9] : memref<128x128xf32, #tpu.memory_space<vmem>>, vector<128x128xf32>
    %cst_10 = arith.constant dense<0.000000e+00> : vector<32x128xf32>
    %15 = tpu.matmul %13, %14, %cst_10 {dimension_numbers = #tpu.dot_dimension_numbers<[1], [0], [0], [1], [0, 0, 1, 1], [], []>} : vector<32x128xf32>, vector<128x128xf32>, vector<32x128xf32> -> vector<32x128xf32>
    %c0_11 = arith.constant 0 : index
    %c0_12 = arith.constant 0 : index
    %16 = vector.load %arg5[%c0_11, %c0_12] : memref<1x128xf32, #tpu.memory_space<vmem>>, vector<1x128xf32>
    %17 = vector.broadcast %16 : vector<1x128xf32> to vector<32x128xf32>
    %18 = arith.addf %15, %17 : vector<32x128xf32>
    %cst_13 = arith.constant 5.000000e-01 : f32
    %19 = vector.broadcast %cst_13 : f32 to vector<32x128xf32>
    %20 = arith.mulf %19, %18 : vector<32x128xf32>
    %cst_14 = arith.constant 0.707106769 : f32
    %21 = vector.broadcast %cst_14 : f32 to vector<32x128xf32>
    %22 = arith.mulf %18, %21 : vector<32x128xf32>
    %23 = math.erf %22 : vector<32x128xf32>
    %cst_15 = arith.constant 1.000000e+00 : f32
    %24 = vector.broadcast %cst_15 : f32 to vector<32x128xf32>
    %25 = arith.addf %24, %23 : vector<32x128xf32>
    %26 = arith.mulf %20, %25 : vector<32x128xf32>
    %c0_16 = arith.constant 0 : index
    %c0_17 = arith.constant 0 : index
    %27 = vector.load %arg6[%c0_16, %c0_17] : memref<128x128xf32, #tpu.memory_space<vmem>>, vector<128x128xf32>
    %cst_18 = arith.constant dense<0.000000e+00> : vector<32x128xf32>
    %28 = tpu.matmul %26, %27, %cst_18 {dimension_numbers = #tpu.dot_dimension_numbers<[1], [0], [0], [1], [0, 0, 1, 1], [], []>} : vector<32x128xf32>, vector<128x128xf32>, vector<32x128xf32> -> vector<32x128xf32>
    %c0_19 = arith.constant 0 : index
    %c0_20 = arith.constant 0 : index
    %29 = vector.load %arg7[%c0_19, %c0_20] : memref<1x128xf32, #tpu.memory_space<vmem>>, vector<1x128xf32>
    %30 = vector.broadcast %29 : vector<1x128xf32> to vector<32x128xf32>
    %31 = arith.addf %28, %30 : vector<32x128xf32>
    %c0_21 = arith.constant 0 : index
    %c0_22 = arith.constant 0 : index
    %32 = vector.load %arg8[%c0_21, %c0_22] : memref<32x128xf32, #tpu.memory_space<vmem>>, vector<32x128xf32>
    tpu.vector_store %arg8[%c0_21, %c0_22], %31 {strides = array<i32>} : memref<32x128xf32, #tpu.memory_space<vmem>>, vector<32x128xf32>,
    return
  }
  func.func @transform_0(%arg0: i32) -> (i32, i32) {
    %c0_i32 = arith.constant 0 : i32
    %c0_i32_0 = arith.constant 0 : i32
    return %arg0, %c0_i32 : i32, i32
  }
  func.func @transform_1(%arg0: i32) -> (i32, i32) {
    %c0_i32 = arith.constant 0 : i32
    %c0_i32_0 = arith.constant 0 : i32
    %c0_i32_1 = arith.constant 0 : i32
    return %c0_i32, %c0_i32_0 : i32, i32
  }
  func.func @transform_2(%arg0: i32) -> (i32, i32) {
    %c0_i32 = arith.constant 0 : i32
    %c0_i32_0 = arith.constant 0 : i32
    %c0_i32_1 = arith.constant 0 : i32
    return %c0_i32, %c0_i32_0 : i32, i32
  }
  func.func @transform_3(%arg0: i32) -> (i32, i32) {
    %c0_i32 = arith.constant 0 : i32
    %c0_i32_0 = arith.constant 0 : i32
    %c0_i32_1 = arith.constant 0 : i32
    return %c0_i32, %c0_i32_0 : i32, i32
  }
  func.func @transform_4(%arg0: i32) -> (i32, i32) {
    %c0_i32 = arith.constant 0 : i32
    %c0_i32_0 = arith.constant 0 : i32
    %c0_i32_1 = arith.constant 0 : i32
    return %c0_i32, %c0_i32_0 : i32, i32
  }
  func.func @transform_5(%arg0: i32) -> (i32, i32) {
    %c0_i32 = arith.constant 0 : i32
    %c0_i32_0 = arith.constant 0 : i32
    %c0_i32_1 = arith.constant 0 : i32
    return %c0_i32, %c0_i32_0 : i32, i32
  }
  func.func @transform_6(%arg0: i32) -> (i32, i32) {
    %c0_i32 = arith.constant 0 : i32
    %c0_i32_0 = arith.constant 0 : i32
    %c0_i32_1 = arith.constant 0 : i32
    return %c0_i32, %c0_i32_0 : i32, i32
  }
  func.func @transform_7(%arg0: i32) -> (i32, i32) {
    %c0_i32 = arith.constant 0 : i32
    %c0_i32_0 = arith.constant 0 : i32
    return %arg0, %c0_i32 : i32, i32
  }
}

</mosaic_0001>

<llo_original>
// kernel: _mlp_forward_impl.1
$region0: #{_mlp_forward_impl.1}
  #allocation0 [shape = 'u32[]', space=smem, size = 0x4, offset = 0x4, fixed_abs, tag = 'smem constant byte address 0x4 - core index']
  #allocation1 [shape = 'u32[144,128]{1,0:T(1,128)}', space=vmem, size = 0x12000, scoped, tag = 'internal scratch']
  %s0 = inlined_call_operand.vmem [shape: f32[32,128], index: 0, kind: input, shape index: {}]
  %s1 = inlined_call_operand.vmem [shape: f32[128,128], index: 1, kind: input, shape index: {}]
  %s2 = inlined_call_operand.vmem [shape: f32[1,128], index: 2, kind: input, shape index: {}]
  %s3 = inlined_call_operand.vmem [shape: f32[128,128], index: 3, kind: input, shape index: {}]
  %s4 = inlined_call_operand.vmem [shape: f32[1,128], index: 4, kind: input, shape index: {}]
  %s5 = inlined_call_operand.vmem [shape: f32[128,128], index: 5, kind: input, shape index: {}]
  %s6 = inlined_call_operand.vmem [shape: f32[1,128], index: 6, kind: input, shape index: {}]
  %s7 = inlined_call_operand.vmem [shape: f32[32,128], index: 7, kind: output, shape index: {}]
  %s8 = sld [smem:[#allocation0]]
  $region38: #{_mlp_forward_impl.1} parent=0
    _
  %s10 = ssub.s32 1, %s8
  %s11 = scalar_select 0, %s10, %s8
  // Predicated region
  $region2: #{_mlp_forward_impl.1} parent=0 // pred_check
    _
  $region3: #{_mlp_forward_impl.1} parent=0 // pred_check_branch
    %13 = sbr.rel (0) target = $region5
  $region4: #{_mlp_forward_impl.1} parent=0 // pred_region
    _
  $region5: #{_mlp_forward_impl.1} parent=0 // pred_fallthru
    _
  // Predicated region
  $region6: #{_mlp_forward_impl.1} parent=0 // pred_check
    _
  $region7: #{_mlp_forward_impl.1} parent=0 // pred_check_branch
    %15 = sbr.rel (0) target = $region9
  $region8: #{_mlp_forward_impl.1} parent=0 // pred_region
    _
  $region9: #{_mlp_forward_impl.1} parent=0 // pred_fallthru
    _
  // Predicated region
  $region10: #{_mlp_forward_impl.1} parent=0 // pred_check
    _
  $region11: #{_mlp_forward_impl.1} parent=0 // pred_check_branch
    %17 = sbr.rel (0) target = $region13
  $region12: #{_mlp_forward_impl.1} parent=0 // pred_region
    _
  $region13: #{_mlp_forward_impl.1} parent=0 // pred_fallthru
    _
  // Predicated region
  $region14: #{_mlp_forward_impl.1} parent=0 // pred_check
    _
  $region15: #{_mlp_forward_impl.1} parent=0 // pred_check_branch
    %19 = sbr.rel (0) target = $region17
  $region16: #{_mlp_forward_impl.1} parent=0 // pred_region
    _
  $region17: #{_mlp_forward_impl.1} parent=0 // pred_fallthru
    _
  // Predicated region
  $region18: #{_mlp_forward_impl.1} parent=0 // pred_check
    _
  $region19: #{_mlp_forward_impl.1} parent=0 // pred_check_branch
    %21 = sbr.rel (0) target = $region21
  $region20: #{_mlp_forward_impl.1} parent=0 // pred_region
    _
  $region21: #{_mlp_forward_impl.1} parent=0 // pred_fallthru
    _
  // Predicated region
  $region22: #{_mlp_forward_impl.1} parent=0 // pred_check
    _
  $region23: #{_mlp_forward_impl.1} parent=0 // pred_check_branch
    %23 = sbr.rel (0) target = $region25
  $region24: #{_mlp_forward_impl.1} parent=0 // pred_region
    _
  $region25: #{_mlp_forward_impl.1} parent=0 // pred_fallthru
    _
  // Predicated region
  $region26: #{_mlp_forward_impl.1} parent=0 // pred_check
    _
  $region27: #{_mlp_forward_impl.1} parent=0 // pred_check_branch
    %25 = sbr.rel (0) target = $region29
  $region28: #{_mlp_forward_impl.1} parent=0 // pred_region
    _
  $region29: #{_mlp_forward_impl.1} parent=0 // pred_fallthru
    _
  %v26 = vld [vmem:[%s0] sm:$0xff]
  %v27 = vld [vmem:[%s0 + $0x8] sm:$0xff]
  %v28 = vld [vmem:[%s0 + $0x10] sm:$0xff]
  %v29 = vld [vmem:[%s0 + $0x18] sm:$0xff]
  %v30 = vld [vmem:[%s1] sm:$0xff]
  %v31 = vld [vmem:[%s1 + $0x8] sm:$0xff]
  %v32 = vld [vmem:[%s1 + $0x10] sm:$0xff]
  %v33 = vld [vmem:[%s1 + $0x18] sm:$0xff]
  %v34 = vld [vmem:[%s1 + $0x20] sm:$0xff]
  %v35 = vld [vmem:[%s1 + $0x28] sm:$0xff]
  %v36 = vld [vmem:[%s1 + $0x30] sm:$0xff]
  %v37 = vld [vmem:[%s1 + $0x38] sm:$0xff]
  %v38 = vld [vmem:[%s1 + $0x40] sm:$0xff]
  %v39 = vld [vmem:[%s1 + $0x48] sm:$0xff]
  %v40 = vld [vmem:[%s1 + $0x50] sm:$0xff]
  %v41 = vld [vmem:[%s1 + $0x58] sm:$0xff]
  %v42 = vld [vmem:[%s1 + $0x60] sm:$0xff]
  %v43 = vld [vmem:[%s1 + $0x68] sm:$0xff]
  %v44 = vld [vmem:[%s1 + $0x70] sm:$0xff]
  %v45 = vld [vmem:[%s1 + $0x78] sm:$0xff]
  %v46 = vld [vmem:[%s2] sm:$0x1]
  %v48 = vlaneseq
  %v49 = vshrl.u32 %v48, 7
  %v50 = vsub.s32 0, %v49
  %v51 = vrot.slane %v46, %v50
  %53 = vmatprep.subr.mxu0 0.0
  %54 = vmatpush1.msra.mxu0 %v30
  %55 = vmatprep.subr.mxu0 0.0
  %56 = vmatpush1.msra.mxu0 %v31
  %57 = vmatprep.subr.mxu0 0.0
  %58 = vmatpush1.msra.mxu0 %v32
  %59 = vmatprep.subr.mxu0 0.0
  %60 = vmatpush1.msra.mxu0 %v33
  %61 = vmatprep.subr.mxu0 0.0
  %62 = vmatpush1.msra.mxu0 %v34
  %63 = vmatprep.subr.mxu0 0.0
  %64 = vmatpush1.msra.mxu0 %v35
  %65 = vmatprep.subr.mxu0 0.0
  %66 = vmatpush1.msra.mxu0 %v36
  %67 = vmatprep.subr.mxu0 0.0
  %68 = vmatpush1.msra.mxu0 %v37
  %69 = vmatprep.subr.mxu0 0.0
  %70 = vmatpush1.msra.mxu0 %v38
  %71 = vmatprep.subr.mxu0 0.0
  %72 = vmatpush1.msra.mxu0 %v39
  %73 = vmatprep.subr.mxu0 0.0
  %74 = vmatpush1.msra.mxu0 %v40
  %75 = vmatprep.subr.mxu0 0.0
  %76 = vmatpush1.msra.mxu0 %v41
  %77 = vmatprep.subr.mxu0 0.0
  %78 = vmatpush1.msra.mxu0 %v42
  %79 = vmatprep.subr.mxu0 0.0
  %80 = vmatpush1.msra.mxu0 %v43
  %81 = vmatprep.subr.mxu0 0.0
  %82 = vmatpush1.msra.mxu0 %v44
  %83 = vmatprep.subr.mxu0 0.0
  %84 = vmatpush1.msra.mxu0 %v45
  %85 = vmatprep.subr.mxu0 0.0
  %86 = vmatpush1.msra.mxu0 0.0
  %87 = vmatprep.subr.mxu0 0.0
  %88 = vmatpush1.msra.mxu0 0.0
  %89 = vmatprep.subr.mxu0 0.0
  %90 = vmatpush1.msra.mxu0 0.0
  %91 = vmatprep.subr.mxu0 0.0
  %92 = vmatpush1.msra.mxu0 0.0
  %93 = vmatprep.subr.mxu0 0.0
  %94 = vmatpush1.msra.mxu0 0.0
  %95 = vmatprep.subr.mxu0 0.0
  %96 = vmatpush1.msra.mxu0 0.0
  %97 = vmatprep.subr.mxu0 0.0
  %98 = vmatpush1.msra.mxu0 0.0
  %99 = vmatprep.subr.mxu0 0.0
  %100 = vmatpush1.msra.mxu0 0.0
  %101 = vmatprep.subr.mxu0 0.0
  %102 = vmatpush1.msra.mxu0 0.0
  %103 = vmatprep.subr.mxu0 0.0
  %104 = vmatpush1.msra.mxu0 0.0
  %105 = vmatprep.subr.mxu0 0.0
  %106 = vmatpush1.msra.mxu0 0.0
  %107 = vmatprep.subr.mxu0 0.0
  %108 = vmatpush1.msra.mxu0 0.0
  %109 = vmatprep.subr.mxu0 0.0
  %110 = vmatpush1.msra.mxu0 0.0
  %111 = vmatprep.subr.mxu0 0.0
  %112 = vmatpush1.msra.mxu0 0.0
  %113 = vmatprep.subr.mxu0 0.0
  %114 = vmatpush1.msra.mxu0 0.0
  %115 = vmatprep.subr.mxu0 0.0
  %116 = vmatpush1.msra.mxu0 0.0
  %117 = vmatprep.mubr.f32.mxu0 0.0
  %118 = vmatmul.mubr.f32.gmra.mrb[0].mxu0 %v26
  %v119 = vpop.f32.mrb[0].mxu0
  %v120 = vadd.f32 %v51, %v119
  %v121 = vpop.f32.mrb[0].mxu0
  %122 = vmatprep.mubr.f32.mxu0 0.0
  %123 = vmatmul.mubr.f32.gmra.mrb[0].mxu0 %v27
  %v124 = vpop.f32.mrb[0].mxu0
  %v125 = vadd.f32 %v51, %v124
  %v126 = vpop.f32.mrb[0].mxu0
  %127 = vmatprep.mubr.f32.mxu0 0.0
  %128 = vmatmul.mubr.f32.gmra.mrb[0].mxu0 %v28
  %v129 = vpop.f32.mrb[0].mxu0
  %v130 = vadd.f32 %v51, %v129
  %v131 = vpop.f32.mrb[0].mxu0
  %132 = vmatprep.mubr.f32.mxu0 0.0
  %133 = vmatmul.mubr.f32.gmra.mrb[0].mxu0 %v29
  %v134 = vpop.f32.mrb[0].mxu0
  %v135 = vadd.f32 %v51, %v134
  %v136 = vpop.f32.mrb[0].mxu0
  %137 = vdwg.mxu0
  %v138 = vmul.f32 %v120, 0.5
  %v139 = vmul.f32 %v125, 0.5
  %v140 = vmul.f32 %v130, 0.5
  %v141 = vmul.f32 %v135, 0.5
  %v142 = vmul.f32 %v120, 0.70710677
  %v143 = vmul.f32 %v125, 0.70710677
  %v144 = vmul.f32 %v130, 0.70710677
  %v145 = vmul.f32 %v135, 0.70710677
  %v146 = verf.f32.pop %v142
  %v147 = verf.f32.pop %v143
  %v148 = verf.f32.pop %v144
  %v149 = verf.f32.pop %v145
  %v150 = vadd.f32 %v146, 1.0
  %v151 = vadd.f32 %v147, 1.0
  %v152 = vadd.f32 %v148, 1.0
  %v153 = vadd.f32 %v149, 1.0
  %v154 = vmul.f32 %v138, %v150
  %v155 = vmul.f32 %v139, %v151
  %v156 = vmul.f32 %v140, %v152
  %v157 = vmul.f32 %v141, %v153
  %v158 = vld [vmem:[%s3] sm:$0xff]
  %v159 = vld [vmem:[%s3 + $0x8] sm:$0xff]
  %v160 = vld [vmem:[%s3 + $0x10] sm:$0xff]
  %v161 = vld [vmem:[%s3 + $0x18] sm:$0xff]
  %v162 = vld [vmem:[%s3 + $0x20] sm:$0xff]
  %v163 = vld [vmem:[%s3 + $0x28] sm:$0xff]
  %v164 = vld [vmem:[%s3 + $0x30] sm:$0xff]
  %v165 = vld [vmem:[%s3 + $0x38] sm:$0xff]
  %v166 = vld [vmem:[%s3 + $0x40] sm:$0xff]
  %v167 = vld [vmem:[%s3 + $0x48] sm:$0xff]
  %v168 = vld [vmem:[%s3 + $0x50] sm:$0xff]
  %v169 = vld [vmem:[%s3 + $0x58] sm:$0xff]
  %v170 = vld [vmem:[%s3 + $0x60] sm:$0xff]
  %v171 = vld [vmem:[%s3 + $0x68] sm:$0xff]
  %v172 = vld [vmem:[%s3 + $0x70] sm:$0xff]
  %v173 = vld [vmem:[%s3 + $0x78] sm:$0xff]
  %v174 = vld [vmem:[%s4] sm:$0x1]
  %v176 = vlaneseq
  %v177 = vshrl.u32 %v176, 7
  %v178 = vsub.s32 0, %v177
  %v179 = vrot.slane %v174, %v178
  %181 = vmatprep.subr.mxu0 0.0
  %182 = vmatpush1.msra.mxu0 %v158
  %183 = vmatprep.subr.mxu0 0.0
  %184 = vmatpush1.msra.mxu0 %v159
  %185 = vmatprep.subr.mxu0 0.0
  %186 = vmatpush1.msra.mxu0 %v160
  %187 = vmatprep.subr.mxu0 0.0
  %188 = vmatpush1.msra.mxu0 %v161
  %189 = vmatprep.subr.mxu0 0.0
  %190 = vmatpush1.msra.mxu0 %v162
  %191 = vmatprep.subr.mxu0 0.0
  %192 = vmatpush1.msra.mxu0 %v163
  %193 = vmatprep.subr.mxu0 0.0
  %194 = vmatpush1.msra.mxu0 %v164
  %195 = vmatprep.subr.mxu0 0.0
  %196 = vmatpush1.msra.mxu0 %v165
  %197 = vmatprep.subr.mxu0 0.0
  %198 = vmatpush1.msra.mxu0 %v166
  %199 = vmatprep.subr.mxu0 0.0
  %200 = vmatpush1.msra.mxu0 %v167
  %201 = vmatprep.subr.mxu0 0.0
  %202 = vmatpush1.msra.mxu0 %v168
  %203 = vmatprep.subr.mxu0 0.0
  %204 = vmatpush1.msra.mxu0 %v169
  %205 = vmatprep.subr.mxu0 0.0
  %206 = vmatpush1.msra.mxu0 %v170
  %207 = vmatprep.subr.mxu0 0.0
  %208 = vmatpush1.msra.mxu0 %v171
  %209 = vmatprep.subr.mxu0 0.0
  %210 = vmatpush1.msra.mxu0 %v172
  %211 = vmatprep.subr.mxu0 0.0
  %212 = vmatpush1.msra.mxu0 %v173
  %213 = vmatprep.subr.mxu0 0.0
  %214 = vmatpush1.msra.mxu0 0.0
  %215 = vmatprep.subr.mxu0 0.0
  %216 = vmatpush1.msra.mxu0 0.0
  %217 = vmatprep.subr.mxu0 0.0
  %218 = vmatpush1.msra.mxu0 0.0
  %219 = vmatprep.subr.mxu0 0.0
  %220 = vmatpush1.msra.mxu0 0.0
  %221 = vmatprep.subr.mxu0 0.0
  %222 = vmatpush1.msra.mxu0 0.0
  %223 = vmatprep.subr.mxu0 0.0
  %224 = vmatpush1.msra.mxu0 0.0
  %225 = vmatprep.subr.mxu0 0.0
  %226 = vmatpush1.msra.mxu0 0.0
  %227 = vmatprep.subr.mxu0 0.0
  %228 = vmatpush1.msra.mxu0 0.0
  %229 = vmatprep.subr.mxu0 0.0
  %230 = vmatpush1.msra.mxu0 0.0
  %231 = vmatprep.subr.mxu0 0.0
  %232 = vmatpush1.msra.mxu0 0.0
  %233 = vmatprep.subr.mxu0 0.0
  %234 = vmatpush1.msra.mxu0 0.0
  %235 = vmatprep.subr.mxu0 0.0
  %236 = vmatpush1.msra.mxu0 0.0
  %237 = vmatprep.subr.mxu0 0.0
  %238 = vmatpush1.msra.mxu0 0.0
  %239 = vmatprep.subr.mxu0 0.0
  %240 = vmatpush1.msra.mxu0 0.0
  %241 = vmatprep.subr.mxu0 0.0
  %242 = vmatpush1.msra.mxu0 0.0
  %243 = vmatprep.subr.mxu0 0.0
  %244 = vmatpush1.msra.mxu0 0.0
  %245 = vmatprep.mubr.f32.mxu0 0.0
  %246 = vmatmul.mubr.f32.gmra.mrb[0].mxu0 %v154
  %v247 = vpop.f32.mrb[0].mxu0
  %v248 = vadd.f32 %v179, %v247
  %v249 = vpop.f32.mrb[0].mxu0
  %250 = vmatprep.mubr.f32.mxu0 0.0
  %251 = vmatmul.mubr.f32.gmra.mrb[0].mxu0 %v155
  %v252 = vpop.f32.mrb[0].mxu0
  %v253 = vadd.f32 %v179, %v252
  %v254 = vpop.f32.mrb[0].mxu0
  %255 = vmatprep.mubr.f32.mxu0 0.0
  %256 = vmatmul.mubr.f32.gmra.mrb[0].mxu0 %v156
  %v257 = vpop.f32.mrb[0].mxu0
  %v258 = vadd.f32 %v179, %v257
  %v259 = vpop.f32.mrb[0].mxu0
  %260 = vmatprep.mubr.f32.mxu0 0.0
  %261 = vmatmul.mubr.f32.gmra.mrb[0].mxu0 %v157
  %v262 = vpop.f32.mrb[0].mxu0
  %v263 = vadd.f32 %v179, %v262
  %v264 = vpop.f32.mrb[0].mxu0
  %265 = vdwg.mxu0
  %v266 = vmul.f32 %v248, 0.5
  %v267 = vmul.f32 %v253, 0.5
  %v268 = vmul.f32 %v258, 0.5
  %v269 = vmul.f32 %v263, 0.5
  %v270 = vmul.f32 %v248, 0.70710677
  %v271 = vmul.f32 %v253, 0.70710677
  %v272 = vmul.f32 %v258, 0.70710677
  %v273 = vmul.f32 %v263, 0.70710677
  %v274 = verf.f32.pop %v270
  %v275 = verf.f32.pop %v271
  %v276 = verf.f32.pop %v272
  %v277 = verf.f32.pop %v273
  %v278 = vadd.f32 %v274, 1.0
  %v279 = vadd.f32 %v275, 1.0
  %v280 = vadd.f32 %v276, 1.0
  %v281 = vadd.f32 %v277, 1.0
  %v282 = vmul.f32 %v266, %v278
  %v283 = vmul.f32 %v267, %v279
  %v284 = vmul.f32 %v268, %v280
  %v285 = vmul.f32 %v269, %v281
  %v286 = vld [vmem:[%s5] sm:$0xff]
  %v287 = vld [vmem:[%s5 + $0x8] sm:$0xff]
  %v288 = vld [vmem:[%s5 + $0x10] sm:$0xff]
  %v289 = vld [vmem:[%s5 + $0x18] sm:$0xff]
  %v290 = vld [vmem:[%s5 + $0x20] sm:$0xff]
  %v291 = vld [vmem:[%s5 + $0x28] sm:$0xff]
  %v292 = vld [vmem:[%s5 + $0x30] sm:$0xff]
  %v293 = vld [vmem:[%s5 + $0x38] sm:$0xff]
  %v294 = vld [vmem:[%s5 + $0x40] sm:$0xff]
  %v295 = vld [vmem:[%s5 + $0x48] sm:$0xff]
  %v296 = vld [vmem:[%s5 + $0x50] sm:$0xff]
  %v297 = vld [vmem:[%s5 + $0x58] sm:$0xff]
  %v298 = vld [vmem:[%s5 + $0x60] sm:$0xff]
  %v299 = vld [vmem:[%s5 + $0x68] sm:$0xff]
  %v300 = vld [vmem:[%s5 + $0x70] sm:$0xff]
  %v301 = vld [vmem:[%s5 + $0x78] sm:$0xff]
  %v302 = vld [vmem:[%s6] sm:$0x1]
  %v304 = vlaneseq
  %v305 = vshrl.u32 %v304, 7
  %v306 = vsub.s32 0, %v305
  %v307 = vrot.slane %v302, %v306
  %309 = vmatprep.subr.mxu0 0.0
  %310 = vmatpush1.msra.mxu0 %v286
  %311 = vmatprep.subr.mxu0 0.0
  %312 = vmatpush1.msra.mxu0 %v287
  %313 = vmatprep.subr.mxu0 0.0
  %314 = vmatpush1.msra.mxu0 %v288
  %315 = vmatprep.subr.mxu0 0.0
  %316 = vmatpush1.msra.mxu0 %v289
  %317 = vmatprep.subr.mxu0 0.0
  %318 = vmatpush1.msra.mxu0 %v290
  %319 = vmatprep.subr.mxu0 0.0
  %320 = vmatpush1.msra.mxu0 %v291
  %321 = vmatprep.subr.mxu0 0.0
  %322 = vmatpush1.msra.mxu0 %v292
  %323 = vmatprep.subr.mxu0 0.0
  %324 = vmatpush1.msra.mxu0 %v293
  %325 = vmatprep.subr.mxu0 0.0
  %326 = vmatpush1.msra.mxu0 %v294
  %327 = vmatprep.subr.mxu0 0.0
  %328 = vmatpush1.msra.mxu0 %v295
  %329 = vmatprep.subr.mxu0 0.0
  %330 = vmatpush1.msra.mxu0 %v296
  %331 = vmatprep.subr.mxu0 0.0
  %332 = vmatpush1.msra.mxu0 %v297
  %333 = vmatprep.subr.mxu0 0.0
  %334 = vmatpush1.msra.mxu0 %v298
  %335 = vmatprep.subr.mxu0 0.0
  %336 = vmatpush1.msra.mxu0 %v299
  %337 = vmatprep.subr.mxu0 0.0
  %338 = vmatpush1.msra.mxu0 %v300
  %339 = vmatprep.subr.mxu0 0.0
  %340 = vmatpush1.msra.mxu0 %v301
  %341 = vmatprep.subr.mxu0 0.0
  %342 = vmatpush1.msra.mxu0 0.0
  %343 = vmatprep.subr.mxu0 0.0
  %344 = vmatpush1.msra.mxu0 0.0
  %345 = vmatprep.subr.mxu0 0.0
  %346 = vmatpush1.msra.mxu0 0.0
  %347 = vmatprep.subr.mxu0 0.0
  %348 = vmatpush1.msra.mxu0 0.0
  %349 = vmatprep.subr.mxu0 0.0
  %350 = vmatpush1.msra.mxu0 0.0
  %351 = vmatprep.subr.mxu0 0.0
  %352 = vmatpush1.msra.mxu0 0.0
  %353 = vmatprep.subr.mxu0 0.0
  %354 = vmatpush1.msra.mxu0 0.0
  %355 = vmatprep.subr.mxu0 0.0
  %356 = vmatpush1.msra.mxu0 0.0
  %357 = vmatprep.subr.mxu0 0.0
  %358 = vmatpush1.msra.mxu0 0.0
  %359 = vmatprep.subr.mxu0 0.0
  %360 = vmatpush1.msra.mxu0 0.0
  %361 = vmatprep.subr.mxu0 0.0
  %362 = vmatpush1.msra.mxu0 0.0
  %363 = vmatprep.subr.mxu0 0.0
  %364 = vmatpush1.msra.mxu0 0.0
  %365 = vmatprep.subr.mxu0 0.0
  %366 = vmatpush1.msra.mxu0 0.0
  %367 = vmatprep.subr.mxu0 0.0
  %368 = vmatpush1.msra.mxu0 0.0
  %369 = vmatprep.subr.mxu0 0.0
  %370 = vmatpush1.msra.mxu0 0.0
  %371 = vmatprep.subr.mxu0 0.0
  %372 = vmatpush1.msra.mxu0 0.0
  %373 = vmatprep.mubr.f32.mxu0 0.0
  %374 = vmatmul.mubr.f32.gmra.mrb[0].mxu0 %v282
  %v375 = vpop.f32.mrb[0].mxu0
  %v376 = vadd.f32 %v307, %v375
  %v377 = vpop.f32.mrb[0].mxu0
  %378 = vmatprep.mubr.f32.mxu0 0.0
  %379 = vmatmul.mubr.f32.gmra.mrb[0].mxu0 %v283
  %v380 = vpop.f32.mrb[0].mxu0
  %v381 = vadd.f32 %v307, %v380
  %v382 = vpop.f32.mrb[0].mxu0
  %383 = vmatprep.mubr.f32.mxu0 0.0
  %384 = vmatmul.mubr.f32.gmra.mrb[0].mxu0 %v284
  %v385 = vpop.f32.mrb[0].mxu0
  %v386 = vadd.f32 %v307, %v385
  %v387 = vpop.f32.mrb[0].mxu0
  %388 = vmatprep.mubr.f32.mxu0 0.0
  %389 = vmatmul.mubr.f32.gmra.mrb[0].mxu0 %v285
  %v390 = vpop.f32.mrb[0].mxu0
  %v391 = vadd.f32 %v307, %v390
  %v392 = vpop.f32.mrb[0].mxu0
  %393 = vdwg.mxu0
  %394 = vst [vmem:[%s7] sm:$0xff] %v376
  %395 = vst [vmem:[%s7 + $0x8] sm:$0xff] %v381
  %396 = vst [vmem:[%s7 + $0x10] sm:$0xff] %v386
  %397 = vst [vmem:[%s7 + $0x18] sm:$0xff] %v391
  // Predicated region
  $region30: #{_mlp_forward_impl.1} parent=0 // pred_check
    _
  $region31: #{_mlp_forward_impl.1} parent=0 // pred_check_branch
    %399 = sbr.rel (0) target = $region33
  $region32: #{_mlp_forward_impl.1} parent=0 // pred_region
    _
  $region33: #{_mlp_forward_impl.1} parent=0 // pred_fallthru
    _
  // Predicated region
  $region34: #{_mlp_forward_impl.1} parent=0 // pred_check
    _
  $region35: #{_mlp_forward_impl.1} parent=0 // pred_check_branch
    %401 = sbr.rel (0) target = $region37
  $region36: #{_mlp_forward_impl.1} parent=0 // pred_region
    _
  $region37: #{_mlp_forward_impl.1} parent=0 // pred_fallthru
    _

// kernel: _mlp_forward_impl.1
$region0: #{_mlp_forward_impl.1}
  #allocation0 [shape = 'u32[]', space=smem, size = 0x4, offset = 0x4, fixed_abs, tag = 'smem constant byte address 0x4 - core index']
  #allocation1 [shape = 'u32[144,128]{1,0:T(1,128)}', space=vmem, size = 0x12000, scoped, tag = 'internal scratch']
  %s0 = inlined_call_operand.vmem [shape: f32[32,128], index: 0, kind: input, shape index: {}]
  %s1 = inlined_call_operand.vmem [shape: f32[128,128], index: 1, kind: input, shape index: {}]
  %s2 = inlined_call_operand.vmem [shape: f32[1,128], index: 2, kind: input, shape index: {}]
  %s3 = inlined_call_operand.vmem [shape: f32[128,128], index: 3, kind: input, shape index: {}]
  %s4 = inlined_call_operand.vmem [shape: f32[1,128], index: 4, kind: input, shape index: {}]
  %s5 = inlined_call_operand.vmem [shape: f32[128,128], index: 5, kind: input, shape index: {}]
  %s6 = inlined_call_operand.vmem [shape: f32[1,128], index: 6, kind: input, shape index: {}]
  %s7 = inlined_call_operand.vmem [shape: f32[32,128], index: 7, kind: output, shape index: {}]
  %s8 = sld [smem:[#allocation0]]
  $region38: #{_mlp_forward_impl.1} parent=0
    _
  %s10 = ssub.s32 1, %s8
  %s11 = scalar_select 0, %s10, %s8
  // Predicated region
  $region2: #{_mlp_forward_impl.1} parent=0 // pred_check
    _
  $region3: #{_mlp_forward_impl.1} parent=0 // pred_check_branch
    %13 = sbr.rel (0) target = $region5
  $region4: #{_mlp_forward_impl.1} parent=0 // pred_region
    _
  $region5: #{_mlp_forward_impl.1} parent=0 // pred_fallthru
    _
  // Predicated region
  $region6: #{_mlp_forward_impl.1} parent=0 // pred_check
    _
  $region7: #{_mlp_forward_impl.1} parent=0 // pred_check_branch
    %15 = sbr.rel (0) target = $region9
  $region8: #{_mlp_forward_impl.1} parent=0 // pred_region
    _
  $region9: #{_mlp_forward_impl.1} parent=0 // pred_fallthru
    _
  // Predicated region
  $region10: #{_mlp_forward_impl.1} parent=0 // pred_check
    _
  $region11: #{_mlp_forward_impl.1} parent=0 // pred_check_branch
    %17 = sbr.rel (0) target = $region13
  $region12: #{_mlp_forward_impl.1} parent=0 // pred_region
    _
  $region13: #{_mlp_forward_impl.1} parent=0 // pred_fallthru
    _
  // Predicated region
  $region14: #{_mlp_forward_impl.1} parent=0 // pred_check
    _
  $region15: #{_mlp_forward_impl.1} parent=0 // pred_check_branch
    %19 = sbr.rel (0) target = $region17
  $region16: #{_mlp_forward_impl.1} parent=0 // pred_region
    _
  $region17: #{_mlp_forward_impl.1} parent=0 // pred_fallthru
    _
  // Predicated region
  $region18: #{_mlp_forward_impl.1} parent=0 // pred_check
    _
  $region19: #{_mlp_forward_impl.1} parent=0 // pred_check_branch
    %21 = sbr.rel (0) target = $region21
  $region20: #{_mlp_forward_impl.1} parent=0 // pred_region
    _
  $region21: #{_mlp_forward_impl.1} parent=0 // pred_fallthru
    _
  // Predicated region
  $region22: #{_mlp_forward_impl.1} parent=0 // pred_check
    _
  $region23: #{_mlp_forward_impl.1} parent=0 // pred_check_branch
    %23 = sbr.rel (0) target = $region25
  $region24: #{_mlp_forward_impl.1} parent=0 // pred_region
    _
  $region25: #{_mlp_forward_impl.1} parent=0 // pred_fallthru
    _
  // Predicated region
  $region26: #{_mlp_forward_impl.1} parent=0 // pred_check
    _
  $region27: #{_mlp_forward_impl.1} parent=0 // pred_check_branch
    %25 = sbr.rel (0) target = $region29
  $region28: #{_mlp_forward_impl.1} parent=0 // pred_region
    _
  $region29: #{_mlp_forward_impl.1} parent=0 // pred_fallthru
    _
  %v26 = vld [vmem:[%s0] sm:$0xff]
  %v27 = vld [vmem:[%s0 + $0x8] sm:$0xff]
  %v28 = vld [vmem:[%s0 + $0x10] sm:$0xff]
  %v29 = vld [vmem:[%s0 + $0x18] sm:$0xff]
  %v30 = vld [vmem:[%s1] sm:$0xff]
  %v31 = vld [vmem:[%s1 + $0x8] sm:$0xff]
  %v32 = vld [vmem:[%s1 + $0x10] sm:$0xff]
  %v33 = vld [vmem:[%s1 + $0x18] sm:$0xff]
  %v34 = vld [vmem:[%s1 + $0x20] sm:$0xff]
  %v35 = vld [vmem:[%s1 + $0x28] sm:$0xff]
  %v36 = vld [vmem:[%s1 + $0x30] sm:$0xff]
  %v37 = vld [vmem:[%s1 + $0x38] sm:$0xff]
  %v38 = vld [vmem:[%s1 + $0x40] sm:$0xff]
  %v39 = vld [vmem:[%s1 + $0x48] sm:$0xff]
  %v40 = vld [vmem:[%s1 + $0x50] sm:$0xff]
  %v41 = vld [vmem:[%s1 + $0x58] sm:$0xff]
  %v42 = vld [vmem:[%s1 + $0x60] sm:$0xff]
  %v43 = vld [vmem:[%s1 + $0x68] sm:$0xff]
  %v44 = vld [vmem:[%s1 + $0x70] sm:$0xff]
  %v45 = vld [vmem:[%s1 + $0x78] sm:$0xff]
  %v46 = vld [vmem:[%s2] sm:$0x1]
  %v48 = vlaneseq
  %v49 = vshrl.u32 %v48, 7
  %v50 = vsub.s32 0, %v49
  %v51 = vrot.slane %v46, %v50
  %53 = vmatprep.subr.mxu0 0.0
  %54 = vmatpush1.msra.mxu0 %v30
  %55 = vmatprep.subr.mxu0 0.0
  %56 = vmatpush1.msra.mxu0 %v31
  %57 = vmatprep.subr.mxu0 0.0
  %58 = vmatpush1.msra.mxu0 %v32
  %59 = vmatprep.subr.mxu0 0.0
  %60 = vmatpush1.msra.mxu0 %v33
  %61 = vmatprep.subr.mxu0 0.0
  %62 = vmatpush1.msra.mxu0 %v34
  %63 = vmatprep.subr.mxu0 0.0
  %64 = vmatpush1.msra.mxu0 %v35
  %65 = vmatprep.subr.mxu0 0.0
  %66 = vmatpush1.msra.mxu0 %v36
  %67 = vmatprep.subr.mxu0 0.0
  %68 = vmatpush1.msra.mxu0 %v37
  %69 = vmatprep.subr.mxu0 0.0
  %70 = vmatpush1.msra.mxu0 %v38
  %71 = vmatprep.subr.mxu0 0.0
  %72 = vmatpush1.msra.mxu0 %v39
  %73 = vmatprep.subr.mxu0 0.0
  %74 = vmatpush1.msra.mxu0 %v40
  %75 = vmatprep.subr.mxu0 0.0
  %76 = vmatpush1.msra.mxu0 %v41
  %77 = vmatprep.subr.mxu0 0.0
  %78 = vmatpush1.msra.mxu0 %v42
  %79 = vmatprep.subr.mxu0 0.0
  %80 = vmatpush1.msra.mxu0 %v43
  %81 = vmatprep.subr.mxu0 0.0
  %82 = vmatpush1.msra.mxu0 %v44
  %83 = vmatprep.subr.mxu0 0.0
  %84 = vmatpush1.msra.mxu0 %v45
  %85 = vmatprep.subr.mxu0 0.0
  %86 = vmatpush1.msra.mxu0 0.0
  %87 = vmatprep.subr.mxu0 0.0
  %88 = vmatpush1.msra.mxu0 0.0
  %89 = vmatprep.subr.mxu0 0.0
  %90 = vmatpush1.msra.mxu0 0.0
  %91 = vmatprep.subr.mxu0 0.0
  %92 = vmatpush1.msra.mxu0 0.0
  %93 = vmatprep.subr.mxu0 0.0
  %94 = vmatpush1.msra.mxu0 0.0
  %95 = vmatprep.subr.mxu0 0.0
  %96 = vmatpush1.msra.mxu0 0.0
  %97 = vmatprep.subr.mxu0 0.0
  %98 = vmatpush1.msra.mxu0 0.0
  %99 = vmatprep.subr.mxu0 0.0
  %100 = vmatpush1.msra.mxu0 0.0
  %101 = vmatprep.subr.mxu0 0.0
  %102 = vmatpush1.msra.mxu0 0.0
  %103 = vmatprep.subr.mxu0 0.0
  %104 = vmatpush1.msra.mxu0 0.0
  %105 = vmatprep.subr.mxu0 0.0
  %106 = vmatpush1.msra.mxu0 0.0
  %107 = vmatprep.subr.mxu0 0.0
  %108 = vmatpush1.msra.mxu0 0.0
  %109 = vmatprep.subr.mxu0 0.0
  %110 = vmatpush1.msra.mxu0 0.0
  %111 = vmatprep.subr.mxu0 0.0
  %112 = vmatpush1.msra.mxu0 0.0
  %113 = vmatprep.subr.mxu0 0.0
  %114 = vmatpush1.msra.mxu0 0.0
  %115 = vmatprep.subr.mxu0 0.0
  %116 = vmatpush1.msra.mxu0 0.0
  %117 = vmatprep.mubr.f32.mxu0 0.0
  %118 = vmatmul.mubr.f32.gmra.mrb[0].mxu0 %v26
  %v119 = vpop.f32.mrb[0].mxu0
  %v120 = vadd.f32 %v51, %v119
  %v121 = vpop.f32.mrb[0].mxu0
  %122 = vmatprep.mubr.f32.mxu0 0.0
  %123 = vmatmul.mubr.f32.gmra.mrb[0].mxu0 %v27
  %v124 = vpop.f32.mrb[0].mxu0
  %v125 = vadd.f32 %v51, %v124
  %v126 = vpop.f32.mrb[0].mxu0
  %127 = vmatprep.mubr.f32.mxu0 0.0
  %128 = vmatmul.mubr.f32.gmra.mrb[0].mxu0 %v28
  %v129 = vpop.f32.mrb[0].mxu0
  %v130 = vadd.f32 %v51, %v129
  %v131 = vpop.f32.mrb[0].mxu0
  %132 = vmatprep.mubr.f32.mxu0 0.0
  %133 = vmatmul.mubr.f32.gmra.mrb[0].mxu0 %v29
  %v134 = vpop.f32.mrb[0].mxu0
  %v135 = vadd.f32 %v51, %v134
  %v136 = vpop.f32.mrb[0].mxu0
  %137 = vdwg.mxu0
  %v138 = vmul.f32 %v120, 0.5
  %v139 = vmul.f32 %v125, 0.5
  %v140 = vmul.f32 %v130, 0.5
  %v141 = vmul.f32 %v135, 0.5
  %v142 = vmul.f32 %v120, 0.70710677
  %v143 = vmul.f32 %v125, 0.70710677
  %v144 = vmul.f32 %v130, 0.70710677
  %v145 = vmul.f32 %v135, 0.70710677
  %v146 = verf.f32.pop %v142
  %v147 = verf.f32.pop %v143
  %v148 = verf.f32.pop %v144
  %v149 = verf.f32.pop %v145
  %v150 = vadd.f32 %v146, 1.0
  %v151 = vadd.f32 %v147, 1.0
  %v152 = vadd.f32 %v148, 1.0
  %v153 = vadd.f32 %v149, 1.0
  %v154 = vmul.f32 %v138, %v150
  %v155 = vmul.f32 %v139, %v151
  %v156 = vmul.f32 %v140, %v152
  %v157 = vmul.f32 %v141, %v153
  %v158 = vld [vmem:[%s3] sm:$0xff]
  %v159 = vld [vmem:[%s3 + $0x8] sm:$0xff]
  %v160 = vld [vmem:[%s3 + $0x10] sm:$0xff]
  %v161 = vld [vmem:[%s3 + $0x18] sm:$0xff]
  %v162 = vld [vmem:[%s3 + $0x20] sm:$0xff]
  %v163 = vld [vmem:[%s3 + $0x28] sm:$0xff]
  %v164 = vld [vmem:[%s3 + $0x30] sm:$0xff]
  %v165 = vld [vmem:[%s3 + $0x38] sm:$0xff]
  %v166 = vld [vmem:[%s3 + $0x40] sm:$0xff]
  %v167 = vld [vmem:[%s3 + $0x48] sm:$0xff]
  %v168 = vld [vmem:[%s3 + $0x50] sm:$0xff]
  %v169 = vld [vmem:[%s3 + $0x58] sm:$0xff]
  %v170 = vld [vmem:[%s3 + $0x60] sm:$0xff]
  %v171 = vld [vmem:[%s3 + $0x68] sm:$0xff]
  %v172 = vld [vmem:[%s3 + $0x70] sm:$0xff]
  %v173 = vld [vmem:[%s3 + $0x78] sm:$0xff]
  %v174 = vld [vmem:[%s4] sm:$0x1]
  %v176 = vlaneseq
  %v177 = vshrl.u32 %v176, 7
  %v178 = vsub.s32 0, %v177
  %v179 = vrot.slane %v174, %v178
  %181 = vmatprep.subr.mxu0 0.0
  %182 = vmatpush1.msra.mxu0 %v158
  %183 = vmatprep.subr.mxu0 0.0
  %184 = vmatpush1.msra.mxu0 %v159
  %185 = vmatprep.subr.mxu0 0.0
  %186 = vmatpush1.msra.mxu0 %v160
  %187 = vmatprep.subr.mxu0 0.0
  %188 = vmatpush1.msra.mxu0 %v161
  %189 = vmatprep.subr.mxu0 0.0
  %190 = vmatpush1.msra.mxu0 %v162
  %191 = vmatprep.subr.mxu0 0.0
  %192 = vmatpush1.msra.mxu0 %v163
  %193 = vmatprep.subr.mxu0 0.0
  %194 = vmatpush1.msra.mxu0 %v164
  %195 = vmatprep.subr.mxu0 0.0
  %196 = vmatpush1.msra.mxu0 %v165
  %197 = vmatprep.subr.mxu0 0.0
  %198 = vmatpush1.msra.mxu0 %v166
  %199 = vmatprep.subr.mxu0 0.0
  %200 = vmatpush1.msra.mxu0 %v167
  %201 = vmatprep.subr.mxu0 0.0
  %202 = vmatpush1.msra.mxu0 %v168
  %203 = vmatprep.subr.mxu0 0.0
  %204 = vmatpush1.msra.mxu0 %v169
  %205 = vmatprep.subr.mxu0 0.0
  %206 = vmatpush1.msra.mxu0 %v170
  %207 = vmatprep.subr.mxu0 0.0
  %208 = vmatpush1.msra.mxu0 %v171
  %209 = vmatprep.subr.mxu0 0.0
  %210 = vmatpush1.msra.mxu0 %v172
  %211 = vmatprep.subr.mxu0 0.0
  %212 = vmatpush1.msra.mxu0 %v173
  %213 = vmatprep.subr.mxu0 0.0
  %214 = vmatpush1.msra.mxu0 0.0
  %215 = vmatprep.subr.mxu0 0.0
  %216 = vmatpush1.msra.mxu0 0.0
  %217 = vmatprep.subr.mxu0 0.0
  %218 = vmatpush1.msra.mxu0 0.0
  %219 = vmatprep.subr.mxu0 0.0
  %220 = vmatpush1.msra.mxu0 0.0
  %221 = vmatprep.subr.mxu0 0.0
  %222 = vmatpush1.msra.mxu0 0.0
  %223 = vmatprep.subr.mxu0 0.0
  %224 = vmatpush1.msra.mxu0 0.0
  %225 = vmatprep.subr.mxu0 0.0
  %226 = vmatpush1.msra.mxu0 0.0
  %227 = vmatprep.subr.mxu0 0.0
  %228 = vmatpush1.msra.mxu0 0.0
  %229 = vmatprep.subr.mxu0 0.0
  %230 = vmatpush1.msra.mxu0 0.0
  %231 = vmatprep.subr.mxu0 0.0
  %232 = vmatpush1.msra.mxu0 0.0
  %233 = vmatprep.subr.mxu0 0.0
  %234 = vmatpush1.msra.mxu0 0.0
  %235 = vmatprep.subr.mxu0 0.0
  %236 = vmatpush1.msra.mxu0 0.0
  %237 = vmatprep.subr.mxu0 0.0
  %238 = vmatpush1.msra.mxu0 0.0
  %239 = vmatprep.subr.mxu0 0.0
  %240 = vmatpush1.msra.mxu0 0.0
  %241 = vmatprep.subr.mxu0 0.0
  %242 = vmatpush1.msra.mxu0 0.0
  %243 = vmatprep.subr.mxu0 0.0
  %244 = vmatpush1.msra.mxu0 0.0
  %245 = vmatprep.mubr.f32.mxu0 0.0
  %246 = vmatmul.mubr.f32.gmra.mrb[0].mxu0 %v154
  %v247 = vpop.f32.mrb[0].mxu0
  %v248 = vadd.f32 %v179, %v247
  %v249 = vpop.f32.mrb[0].mxu0
  %250 = vmatprep.mubr.f32.mxu0 0.0
  %251 = vmatmul.mubr.f32.gmra.mrb[0].mxu0 %v155
  %v252 = vpop.f32.mrb[0].mxu0
  %v253 = vadd.f32 %v179, %v252
  %v254 = vpop.f32.mrb[0].mxu0
  %255 = vmatprep.mubr.f32.mxu0 0.0
  %256 = vmatmul.mubr.f32.gmra.mrb[0].mxu0 %v156
  %v257 = vpop.f32.mrb[0].mxu0
  %v258 = vadd.f32 %v179, %v257
  %v259 = vpop.f32.mrb[0].mxu0
  %260 = vmatprep.mubr.f32.mxu0 0.0
  %261 = vmatmul.mubr.f32.gmra.mrb[0].mxu0 %v157
  %v262 = vpop.f32.mrb[0].mxu0
  %v263 = vadd.f32 %v179, %v262
  %v264 = vpop.f32.mrb[0].mxu0
  %265 = vdwg.mxu0
  %v266 = vmul.f32 %v248, 0.5
  %v267 = vmul.f32 %v253, 0.5
  %v268 = vmul.f32 %v258, 0.5
  %v269 = vmul.f32 %v263, 0.5
  %v270 = vmul.f32 %v248, 0.70710677
  %v271 = vmul.f32 %v253, 0.70710677
  %v272 = vmul.f32 %v258, 0.70710677
  %v273 = vmul.f32 %v263, 0.70710677
  %v274 = verf.f32.pop %v270
  %v275 = verf.f32.pop %v271
  %v276 = verf.f32.pop %v272
  %v277 = verf.f32.pop %v273
  %v278 = vadd.f32 %v274, 1.0
  %v279 = vadd.f32 %v275, 1.0
  %v280 = vadd.f32 %v276, 1.0
  %v281 = vadd.f32 %v277, 1.0
  %v282 = vmul.f32 %v266, %v278
  %v283 = vmul.f32 %v267, %v279
  %v284 = vmul.f32 %v268, %v280
  %v285 = vmul.f32 %v269, %v281
  %v286 = vld [vmem:[%s5] sm:$0xff]
  %v287 = vld [vmem:[%s5 + $0x8] sm:$0xff]
  %v288 = vld [vmem:[%s5 + $0x10] sm:$0xff]
  %v289 = vld [vmem:[%s5 + $0x18] sm:$0xff]
  %v290 = vld [vmem:[%s5 + $0x20] sm:$0xff]
  %v291 = vld [vmem:[%s5 + $0x28] sm:$0xff]
  %v292 = vld [vmem:[%s5 + $0x30] sm:$0xff]
  %v293 = vld [vmem:[%s5 + $0x38] sm:$0xff]
  %v294 = vld [vmem:[%s5 + $0x40] sm:$0xff]
  %v295 = vld [vmem:[%s5 + $0x48] sm:$0xff]
  %v296 = vld [vmem:[%s5 + $0x50] sm:$0xff]
  %v297 = vld [vmem:[%s5 + $0x58] sm:$0xff]
  %v298 = vld [vmem:[%s5 + $0x60] sm:$0xff]
  %v299 = vld [vmem:[%s5 + $0x68] sm:$0xff]
  %v300 = vld [vmem:[%s5 + $0x70] sm:$0xff]
  %v301 = vld [vmem:[%s5 + $0x78] sm:$0xff]
  %v302 = vld [vmem:[%s6] sm:$0x1]
  %v304 = vlaneseq
  %v305 = vshrl.u32 %v304, 7
  %v306 = vsub.s32 0, %v305
  %v307 = vrot.slane %v302, %v306
  %309 = vmatprep.subr.mxu0 0.0
  %310 = vmatpush1.msra.mxu0 %v286
  %311 = vmatprep.subr.mxu0 0.0
  %312 = vmatpush1.msra.mxu0 %v287
  %313 = vmatprep.subr.mxu0 0.0
  %314 = vmatpush1.msra.mxu0 %v288
  %315 = vmatprep.subr.mxu0 0.0
  %316 = vmatpush1.msra.mxu0 %v289
  %317 = vmatprep.subr.mxu0 0.0
  %318 = vmatpush1.msra.mxu0 %v290
  %319 = vmatprep.subr.mxu0 0.0
  %320 = vmatpush1.msra.mxu0 %v291
  %321 = vmatprep.subr.mxu0 0.0
  %322 = vmatpush1.msra.mxu0 %v292
  %323 = vmatprep.subr.mxu0 0.0
  %324 = vmatpush1.msra.mxu0 %v293
  %325 = vmatprep.subr.mxu0 0.0
  %326 = vmatpush1.msra.mxu0 %v294
  %327 = vmatprep.subr.mxu0 0.0
  %328 = vmatpush1.msra.mxu0 %v295
  %329 = vmatprep.subr.mxu0 0.0
  %330 = vmatpush1.msra.mxu0 %v296
  %331 = vmatprep.subr.mxu0 0.0
  %332 = vmatpush1.msra.mxu0 %v297
  %333 = vmatprep.subr.mxu0 0.0
  %334 = vmatpush1.msra.mxu0 %v298
  %335 = vmatprep.subr.mxu0 0.0
  %336 = vmatpush1.msra.mxu0 %v299
  %337 = vmatprep.subr.mxu0 0.0
  %338 = vmatpush1.msra.mxu0 %v300
  %339 = vmatprep.subr.mxu0 0.0
  %340 = vmatpush1.msra.mxu0 %v301
  %341 = vmatprep.subr.mxu0 0.0
  %342 = vmatpush1.msra.mxu0 0.0
  %343 = vmatprep.subr.mxu0 0.0
  %344 = vmatpush1.msra.mxu0 0.0
  %345 = vmatprep.subr.mxu0 0.0
  %346 = vmatpush1.msra.mxu0 0.0
  %347 = vmatprep.subr.mxu0 0.0
  %348 = vmatpush1.msra.mxu0 0.0
  %349 = vmatprep.subr.mxu0 0.0
  %350 = vmatpush1.msra.mxu0 0.0
  %351 = vmatprep.subr.mxu0 0.0
  %352 = vmatpush1.msra.mxu0 0.0
  %353 = vmatprep.subr.mxu0 0.0
  %354 = vmatpush1.msra.mxu0 0.0
  %355 = vmatprep.subr.mxu0 0.0
  %356 = vmatpush1.msra.mxu0 0.0
  %357 = vmatprep.subr.mxu0 0.0
  %358 = vmatpush1.msra.mxu0 0.0
  %359 = vmatprep.subr.mxu0 0.0
  %360 = vmatpush1.msra.mxu0 0.0
  %361 = vmatprep.subr.mxu0 0.0
  %362 = vmatpush1.msra.mxu0 0.0
  %363 = vmatprep.subr.mxu0 0.0
  %364 = vmatpush1.msra.mxu0 0.0
  %365 = vmatprep.subr.mxu0 0.0
  %366 = vmatpush1.msra.mxu0 0.0
  %367 = vmatprep.subr.mxu0 0.0
  %368 = vmatpush1.msra.mxu0 0.0
  %369 = vmatprep.subr.mxu0 0.0
  %370 = vmatpush1.msra.mxu0 0.0
  %371 = vmatprep.subr.mxu0 0.0
  %372 = vmatpush1.msra.mxu0 0.0
  %373 = vmatprep.mubr.f32.mxu0 0.0
  %374 = vmatmul.mubr.f32.gmra.mrb[0].mxu0 %v282
  %v375 = vpop.f32.mrb[0].mxu0
  %v376 = vadd.f32 %v307, %v375
  %v377 = vpop.f32.mrb[0].mxu0
  %378 = vmatprep.mubr.f32.mxu0 0.0
  %379 = vmatmul.mubr.f32.gmra.mrb[0].mxu0 %v283
  %v380 = vpop.f32.mrb[0].mxu0
  %v381 = vadd.f32 %v307, %v380
  %v382 = vpop.f32.mrb[0].mxu0
  %383 = vmatprep.mubr.f32.mxu0 0.0
  %384 = vmatmul.mubr.f32.gmra.mrb[0].mxu0 %v284
  %v385 = vpop.f32.mrb[0].mxu0
  %v386 = vadd.f32 %v307, %v385
  %v387 = vpop.f32.mrb[0].mxu0
  %388 = vmatprep.mubr.f32.mxu0 0.0
  %389 = vmatmul.mubr.f32.gmra.mrb[0].mxu0 %v285
  %v390 = vpop.f32.mrb[0].mxu0
  %v391 = vadd.f32 %v307, %v390
  %v392 = vpop.f32.mrb[0].mxu0
  %393 = vdwg.mxu0
  %394 = vst [vmem:[%s7] sm:$0xff] %v376
  %395 = vst [vmem:[%s7 + $0x8] sm:$0xff] %v381
  %396 = vst [vmem:[%s7 + $0x10] sm:$0xff] %v386
  %397 = vst [vmem:[%s7 + $0x18] sm:$0xff] %v391
  // Predicated region
  $region30: #{_mlp_forward_impl.1} parent=0 // pred_check
    _
  $region31: #{_mlp_forward_impl.1} parent=0 // pred_check_branch
    %399 = sbr.rel (0) target = $region33
  $region32: #{_mlp_forward_impl.1} parent=0 // pred_region
    _
  $region33: #{_mlp_forward_impl.1} parent=0 // pred_fallthru
    _
  // Predicated region
  $region34: #{_mlp_forward_impl.1} parent=0 // pred_check
    _
  $region35: #{_mlp_forward_impl.1} parent=0 // pred_check_branch
    %401 = sbr.rel (0) target = $region37
  $region36: #{_mlp_forward_impl.1} parent=0 // pred_region
    _
  $region37: #{_mlp_forward_impl.1} parent=0 // pred_fallthru
    _

</llo_original>
